<compile_context>
chip_gen: v7x
topology: tpu7x:2x2x1
jax: 0.10.0
libtpu: 0.0.40
codegen_flags: <defaults>
</compile_context>

<pallas_src>
import jax
import jax.numpy as jnp
from jax.experimental import pallas as pl
from jax.experimental.pallas import tpu as pltpu

EXPAND_SIZE = 4                            # the "4" in expand(-1, 4, -1)
_SMALL_OUTPUT_BYTES = 2 * 1024 * 1024      # below this, plain jnp.broadcast_to
_VMEM_BUDGET_BYTES = 8 * 1024 * 1024       # double-buffered in+out tile budget
_MAX_TB = 1024                             # >=512 rows already ~HBM roofline
_NUM_CORES_HINT = 2                        # v7x has 2 TensorCores per chip


def _round_up(x: int, m: int) -> int:
    return ((x + m - 1) // m) * m


def _sublane_multiple(dtype) -> int:
    """Minimum second-minor block multiple for packed sublanes."""
    itemsize = jnp.dtype(dtype).itemsize
    return max(8, 32 // itemsize)          # 8 for f32, 16 for bf16, 32 for int8


def _expand_kernel(x_ref, o_ref):
    # x_ref: (TB, D); o_ref: (TB, EXPAND_SIZE * D).
    # out2d[b, c*D + d] = x[b, d]  <=>  out[b, c, d] = x[b, 0, d]
    d = x_ref.shape[-1]
    x = x_ref[...]
    for c in range(EXPAND_SIZE):           # unrolled slice stores, no concat
        o_ref[:, c * d:(c + 1) * d] = x


def _choose_tb(B: int, D: int, dtype) -> int:
    """Pick a batch-tile size: big enough to amortize the ~0.35 us per-step
    overhead, small enough that double-buffered in+out tiles fit the VMEM
    budget, and split so the parallel grid axis gets >= 2 steps per core."""
    itemsize = jnp.dtype(dtype).itemsize
    sub = _sublane_multiple(dtype)
    # Double-buffered input (TB*D) + output (TB*4*D) per buffer pair.
    per_row_bytes = 2 * (1 + EXPAND_SIZE) * D * itemsize
    tb = max(sub, _VMEM_BUDGET_BYTES // per_row_bytes)
    tb = min(tb, _MAX_TB)
    tb = max(sub, (tb // sub) * sub)        # sublane-aligned second-minor dim
    tb = min(tb, _round_up(B, sub))         # don't over-allocate for small B
    # Keep >= 2 steps per TensorCore (>= 4 total, even) when B permits, so
    # v7x's 2 TCs both stay pipelined (also helps DMA overlap on v5e/v6e).
    min_steps = 2 * _NUM_CORES_HINT
    if B >= min_steps * sub:
        while pl.cdiv(B, tb) < min_steps and tb > sub:
            tb = max(sub, ((tb // 2) // sub) * sub)
    return tb


def expand_f32_r3(x: jax.Array, *, force_pallas: bool = False) -> jax.Array:
    """Equivalent of torch `input.expand(-1, 4, -1)` for x of shape (B, 1, D)."""
    assert x.ndim == 3 and x.shape[1] == 1, "expects (B, 1, D) input"
    B, _, D = x.shape
    itemsize = jnp.dtype(x.dtype).itemsize
    out_bytes = B * EXPAND_SIZE * D * itemsize

    if out_bytes < _SMALL_OUTPUT_BYTES and not force_pallas:
        # Tiny case: pallas_call launch + pipeline prologue dominates; let
        # XLA emit the (fusable) broadcast directly.
        return jnp.broadcast_to(x, (B, EXPAND_SIZE, D))

    x2d = x.reshape(B, D)                  # free, contiguous
    tb = _choose_tb(B, D, x.dtype)

    # Actual double-buffered footprint of the chosen tiles, with headroom.
    tile_bytes = (1 + EXPAND_SIZE) * tb * D * itemsize
    vmem_limit = min(32 << 20, max(4 << 20, 4 * tile_bytes))

    out2d = pl.pallas_call(
        _expand_kernel,
        out_shape=jax.ShapeDtypeStruct((B, EXPAND_SIZE * D), x.dtype),
        grid_spec=pltpu.PrefetchScalarGridSpec(
            num_scalar_prefetch=0,
            grid=(pl.cdiv(B, tb),),
            in_specs=[pl.BlockSpec((tb, D), lambda i: (i, 0))],
            out_specs=pl.BlockSpec((tb, EXPAND_SIZE * D), lambda i: (i, 0)),
        ),
        compiler_params=pltpu.CompilerParams(
            dimension_semantics=("parallel",),
            vmem_limit_bytes=int(vmem_limit),
        ),
    )(x2d)

    return out2d.reshape(B, EXPAND_SIZE, D)


if __name__ == "__main__":
    key = jax.random.PRNGKey(0)

    # Original unit-test-like small shape (2, 1, 128): goes through the
    # tiny-input fast path.
    x_small = jax.random.normal(key, (2, 1, 128), dtype=jnp.float32)
    ref_small = jnp.broadcast_to(x_small, (2, EXPAND_SIZE, 128))
    out_small = jax.block_until_ready(expand_f32_r3(x_small))
    assert out_small.shape == (2, EXPAND_SIZE, 128)
    assert out_small.dtype == jnp.float32
    assert jnp.array_equal(out_small, ref_small)

    # Same small shape forced through the Pallas kernel (exercises the kernel
    # body and partial-block masking at a tiny size).
    out_forced = jax.block_until_ready(expand_f32_r3(x_small, force_pallas=True))
    assert jnp.array_equal(out_forced, ref_small)

    # Moderate shape that exercises the multi-step, double-buffered Pallas
    # path (output 4 MiB -> above the small-size threshold; 4 grid steps).
    B, D = 2048, 128
    x = jax.random.normal(jax.random.PRNGKey(0), (B, 1, D), dtype=jnp.float32)
    out = jax.block_until_ready(expand_f32_r3(x))
    ref = jnp.broadcast_to(x, (B, EXPAND_SIZE, D))
    assert out.shape == (B, EXPAND_SIZE, D)
    assert out.dtype == jnp.float32
    assert jnp.array_equal(out, ref)

    print("KERNEL_OK")
</pallas_src>

<mosaic_0001>
module attributes {stable_mosaic.version = 11 : i64} {
  func.func @_expand_kernel(%arg0: i32, %arg1: memref<8x128xf32, #tpu.memory_space<vmem>>, %arg2: memref<8x512xf32, #tpu.memory_space<vmem>>) attributes {dimension_semantics = [#tpu.dimension_semantics<parallel>], iteration_bounds = array<i64: 1>, scalar_prefetch = 0 : i64, scratch_operands = 0 : i64, tpu.core_type = #tpu.core_type<tc>, window_params = [{transform_indices = @transform_0, window_bounds = array<i64: 8, 128>}, {transform_indices = @transform_1, window_bounds = array<i64: 8, 512>}]} {
    %c0 = arith.constant 0 : index
    %c0_0 = arith.constant 0 : index
    %0 = vector.load %arg1[%c0, %c0_0] : memref<8x128xf32, #tpu.memory_space<vmem>>, vector<8x128xf32>
    %c0_1 = arith.constant 0 : index
    %c0_2 = arith.constant 0 : index
    %1 = vector.load %arg2[%c0_1, %c0_2] : memref<8x512xf32, #tpu.memory_space<vmem>>, vector<8x128xf32>
    tpu.vector_store %arg2[%c0_1, %c0_2], %0 {strides = array<i32>} : memref<8x512xf32, #tpu.memory_space<vmem>>, vector<8x128xf32>,
    %c0_3 = arith.constant 0 : index
    %c128 = arith.constant 128 : index
    %2 = vector.load %arg2[%c0_3, %c128] : memref<8x512xf32, #tpu.memory_space<vmem>>, vector<8x128xf32>
    tpu.vector_store %arg2[%c0_3, %c128], %0 {strides = array<i32>} : memref<8x512xf32, #tpu.memory_space<vmem>>, vector<8x128xf32>,
    %c0_4 = arith.constant 0 : index
    %c256 = arith.constant 256 : index
    %3 = vector.load %arg2[%c0_4, %c256] : memref<8x512xf32, #tpu.memory_space<vmem>>, vector<8x128xf32>
    tpu.vector_store %arg2[%c0_4, %c256], %0 {strides = array<i32>} : memref<8x512xf32, #tpu.memory_space<vmem>>, vector<8x128xf32>,
    %c0_5 = arith.constant 0 : index
    %c384 = arith.constant 384 : index
    %4 = vector.load %arg2[%c0_5, %c384] : memref<8x512xf32, #tpu.memory_space<vmem>>, vector<8x128xf32>
    tpu.vector_store %arg2[%c0_5, %c384], %0 {strides = array<i32>} : memref<8x512xf32, #tpu.memory_space<vmem>>, vector<8x128xf32>,
    return
  }
  func.func @transform_0(%arg0: i32) -> (i32, i32) {
    %c0_i32 = arith.constant 0 : i32
    %c0_i32_0 = arith.constant 0 : i32
    return %arg0, %c0_i32 : i32, i32
  }
  func.func @transform_1(%arg0: i32) -> (i32, i32) {
    %c0_i32 = arith.constant 0 : i32
    %c0_i32_0 = arith.constant 0 : i32
    return %arg0, %c0_i32 : i32, i32
  }
}

</mosaic_0001>

<llo_original>
// kernel: tpu_custom_call.1
$region0: #{tpu_custom_call.1}
  #allocation0 [shape = 'u32[]', space=smem, size = 0x4, offset = 0x4, fixed_abs, tag = 'smem constant byte address 0x4 - core index']
  #allocation1 [shape = 'u32[144,128]{1,0:T(1,128)}', space=vmem, size = 0x12000, scoped, tag = 'internal scratch']
  %s0 = inlined_call_operand.hbm [shape: f32[2,128], index: 0, kind: input, shape index: {}]
  %s1 = inlined_call_operand.hbm [shape: f32[2,512], index: 1, kind: output, shape index: {}]
  %s2 = sld [smem:[#allocation0]]
  $region18: #{tpu_custom_call.1} parent=0
    _
  %s4 = ssub.s32 1, %s2
  %s5 = scalar_select 0, %s4, %s2
  $region1: #{tpu_custom_call.1} parent=0
    #allocation2 [shape = 'u8[4096]{0}', space=vmem, size = 0x1000, scoped, tag = 'input window, operand 0, single buffered']
    #allocation3 [shape = 's32[1]{0}', space=sflag, size = 0x4, scoped, tag = 'scoped memory for tpu_custom_call.1']
    #allocation4 [shape = 's32[1]{0}', space=sflag, size = 0x4, scoped, tag = 'scoped memory for tpu_custom_call.1']
    #allocation5 [shape = 'u8[16384]{0}', space=vmem, size = 0x4000, scoped, tag = 'output window, operand 0, single buffered']
    %6 = vsyncpa [#allocation3], 0
    %7 = vsyncpa [#allocation4], 0
    // Predicated region
    $region2: #{tpu_custom_call.1} parent=1 // pred_check
      _
    $region3: #{tpu_custom_call.1} parent=1 // pred_check_branch
      %9 = sbr.rel (0) target = $region5
    $region4: #{tpu_custom_call.1} parent=1 // pred_region
      %s11 = ssub.s32 128, 32
      %12 = vsyncadd [#allocation3], %s11
      %s13 = sshll.u32 [#allocation2], 4
      %s14 = int_to_ptr.vmem [resolvable:$true] %s13
      %19 = dma.hbm_to_vmem [thread:$0]  %s0, 32, %s14, [#allocation3], 32, 32, 2
    $region5: #{tpu_custom_call.1} parent=1 // pred_fallthru
      _
    // Predicated region
    $region6: #{tpu_custom_call.1} parent=1 // pred_check
      _
    $region7: #{tpu_custom_call.1} parent=1 // pred_check_branch
      %21 = sbr.rel (0) target = $region9
    $region8: #{tpu_custom_call.1} parent=1 // pred_region
      %22 = dma.done [#allocation3], 128
    $region9: #{tpu_custom_call.1} parent=1 // pred_fallthru
      _
    %v23 = vld [vmem:[#allocation2] sm:$0xff]
    %v25 = vcombine.high %v23, %v23
    %v27 = vunpack.c.l.s4 1983009808
    %v28 = vunpack.c.0.s8 %v27
    %v29 = vlaneseq
    %v30 = vshrl.u32 %v29, 7
    %v31 = vsub.s32 %v28, %v30
    %v32 = vrot.slane %v23, %v31
    %v34 = vunpack.c.l.s4 1983009808
    %v35 = vunpack.c.0.s8 %v34
    %v36 = vlaneseq
    %v37 = vshrl.u32 %v36, 7
    %v38 = vsub.s32 %v35, %v37
    %v39 = vrot.slane %v25, %v38
    %v40 = vcombine.high %v32, %v32
    %v41 = vcombine.high %v39, %v39
    %46 = vst [vmem:[#allocation5] sm:$0x3] %v32
    %47 = vst [vmem:[#allocation5 + $0x8] sm:$0x3] %v40
    %48 = vst [vmem:[#allocation5 + $0x10] sm:$0x3] %v39
    %49 = vst [vmem:[#allocation5 + $0x18] sm:$0x3] %v41
    %50 = vst [vmem:[#allocation5 + $0x2] sm:$0x3] %v32
    %51 = vst [vmem:[#allocation5 + $0xa] sm:$0x3] %v40
    %52 = vst [vmem:[#allocation5 + $0x12] sm:$0x3] %v39
    %53 = vst [vmem:[#allocation5 + $0x1a] sm:$0x3] %v41
    %54 = vst [vmem:[#allocation5 + $0x4] sm:$0x3] %v32
    %55 = vst [vmem:[#allocation5 + $0xc] sm:$0x3] %v40
    %56 = vst [vmem:[#allocation5 + $0x14] sm:$0x3] %v39
    %57 = vst [vmem:[#allocation5 + $0x1c] sm:$0x3] %v41
    %58 = vst [vmem:[#allocation5 + $0x6] sm:$0x3] %v32
    %59 = vst [vmem:[#allocation5 + $0xe] sm:$0x3] %v40
    %60 = vst [vmem:[#allocation5 + $0x16] sm:$0x3] %v39
    %61 = vst [vmem:[#allocation5 + $0x1e] sm:$0x3] %v41
    // Predicated region
    $region10: #{tpu_custom_call.1} parent=1 // pred_check
      _
    $region11: #{tpu_custom_call.1} parent=1 // pred_check_branch
      %63 = sbr.rel (0) target = $region13
    $region12: #{tpu_custom_call.1} parent=1 // pred_region
      %s65 = ssub.s32 512, 128
      %66 = vsyncadd [#allocation4], %s65
      %s67 = sshll.u32 [#allocation5], 4
      %s68 = int_to_ptr.vmem [resolvable:$true] %s67
      %73 = dma.vmem_to_hbm [thread:$0]  %s68, 128, %s1, [#allocation4], 128, 128, 8
    $region13: #{tpu_custom_call.1} parent=1 // pred_fallthru
      _
    // Predicated region
    $region14: #{tpu_custom_call.1} parent=1 // pred_check
      _
    $region15: #{tpu_custom_call.1} parent=1 // pred_check_branch
      %75 = sbr.rel (0) target = $region17
    $region16: #{tpu_custom_call.1} parent=1 // pred_region
      %76 = dma.done [#allocation4], 512
    $region17: #{tpu_custom_call.1} parent=1 // pred_fallthru
      _
    %77 = vsyncpa [#allocation3], 1
    %78 = vsyncpa [#allocation4], 1

</llo_original>
